<compile_context>
chip_gen: v6e
topology: v6e:2x2x1
jax: 0.10.0
libtpu: 0.0.40
codegen_flags: <defaults>
</compile_context>

<pallas_src>
import functools
import math

import jax
import jax.numpy as jnp
from jax.experimental import pallas as pl
from jax.experimental.pallas import tpu as pltpu

_COLS = 1024        # lane-dense slab width (multiple of 128)
_TILE_ROWS = 256    # 256 x 1024 x 4B = 1 MiB per f32 tile per operand


def _dropout_logit_kernel(bits_ref, x_ref, o_ref, *, threshold, mask_scale):
    x = x_ref[...]
    # drop with probability drop_prob: uint32 bits < round(drop_prob * 2^32)
    drop = bits_ref[...] < jnp.uint32(threshold)
    scale = jnp.asarray(mask_scale, dtype=x.dtype)
    o_ref[...] = jnp.where(drop, x - scale, x)


def dropout_logit(x, drop_prob, *, training=True, seed=0):
    """JAX/Pallas equivalent of DropOutLogit.forward."""
    if drop_prob is None or drop_prob == 0.0 or not training:
        return x

    orig_shape = x.shape
    orig_dtype = x.dtype
    total = math.prod(orig_shape)

    # Match the PyTorch mask-scale choice based on dtype.
    mask_scale = 1.0e8 if orig_dtype == jnp.float32 else 1.0e4
    threshold = min(int(round(float(drop_prob) * (2 ** 32))), 2 ** 32 - 1)

    # Flatten to a wide lane-dense slab, padding so the grid divides exactly.
    rows = pl.cdiv(total, _COLS)
    if rows <= _TILE_ROWS:
        tile_rows = rows                      # single grid step (tiny tensors)
    else:
        tile_rows = _TILE_ROWS
        rows = pl.cdiv(rows, tile_rows) * tile_rows
    padded = rows * _COLS

    flat = x.reshape(-1)
    if padded != total:
        flat = jnp.pad(flat, (0, padded - total))
    x2d = flat.reshape(rows, _COLS)

    # Random bits generated outside the kernel (see module docstring / TODO).
    key = jax.random.PRNGKey(seed)
    bits = jax.random.bits(key, (rows, _COLS), dtype=jnp.uint32)

    kernel = functools.partial(
        _dropout_logit_kernel, threshold=threshold, mask_scale=mask_scale
    )

    grid = (rows // tile_rows,)
    block = (tile_rows, _COLS)
    idx = lambda i: (i, 0)

    out2d = pl.pallas_call(
        kernel,
        out_shape=jax.ShapeDtypeStruct((rows, _COLS), orig_dtype),
        grid=grid,
        in_specs=[
            pl.BlockSpec(block, idx),   # random bits
            pl.BlockSpec(block, idx),   # x slab
        ],
        out_specs=pl.BlockSpec(block, idx),
        input_output_aliases={1: 0},    # reuse x's buffer for the output
        compiler_params=pltpu.CompilerParams(
            dimension_semantics=("parallel",)
        ),
    )(bits, x2d)

    return out2d.reshape(-1)[:total].reshape(orig_shape)


if __name__ == "__main__":
    key = jax.random.PRNGKey(0)
    # Small NCHW logits tensor, consistent with the module's typical usage.
    x = jax.random.normal(key, (2, 4, 16, 16), dtype=jnp.float32)

    drop_prob = 0.25
    y = dropout_logit(x, drop_prob, training=True, seed=0)
    y = jax.block_until_ready(y)

    # Sanity checks: every element is either untouched or shifted down ~1e8.
    diff = x - y
    is_kept = jnp.isclose(diff, 0.0)
    is_dropped = jnp.isclose(diff, 1.0e8)
    assert bool(jnp.all(is_kept | is_dropped))
    frac_dropped = float(jnp.mean(is_dropped.astype(jnp.float32)))
    assert 0.05 < frac_dropped < 0.60, frac_dropped

    # Eval mode / drop_prob == 0 are identity.
    y_eval = jax.block_until_ready(dropout_logit(x, drop_prob, training=False))
    assert bool(jnp.all(y_eval == x))
    y_p0 = jax.block_until_ready(dropout_logit(x, 0.0, training=True))
    assert bool(jnp.all(y_p0 == x))

    print("KERNEL_OK")
</pallas_src>

<mosaic_0001>
module attributes {stable_mosaic.version = 11 : i64} {
  func.func @_dropout_logit_kernel(%arg0: i32, %arg1: memref<2x1024xi32, #tpu.memory_space<vmem>>, %arg2: memref<2x1024xf32, #tpu.memory_space<vmem>>, %arg3: memref<2x1024xf32, #tpu.memory_space<vmem>>) attributes {dimension_semantics = [#tpu.dimension_semantics<parallel>], iteration_bounds = array<i64: 1>, scalar_prefetch = 0 : i64, scratch_operands = 0 : i64, tpu.core_type = #tpu.core_type<tc>, window_params = [{transform_indices = @transform_0, window_bounds = array<i64: 2, 1024>}, {transform_indices = @transform_1, window_bounds = array<i64: 2, 1024>}, {transform_indices = @transform_2, window_bounds = array<i64: 2, 1024>}]} {
    %c0 = arith.constant 0 : index
    %c0_0 = arith.constant 0 : index
    %0 = vector.load %arg2[%c0, %c0_0] : memref<2x1024xf32, #tpu.memory_space<vmem>>, vector<2x1024xf32>
    %c0_1 = arith.constant 0 : index
    %c0_2 = arith.constant 0 : index
    %1 = vector.load %arg1[%c0_1, %c0_2] : memref<2x1024xi32, #tpu.memory_space<vmem>>, vector<2x1024xi32>
    %c1073741824_i32 = arith.constant 1073741824 : i32
    %2 = vector.broadcast %c1073741824_i32 : i32 to vector<2x1024xi32>
    %3 = arith.cmpi ult, %1, %2 : vector<2x1024xi32>
    %cst = arith.constant 1.000000e+08 : f32
    %4 = vector.broadcast %cst : f32 to vector<2x1024xf32>
    %5 = arith.subf %0, %4 : vector<2x1024xf32>
    %6 = arith.select %3, %5, %0 : vector<2x1024xi1>, vector<2x1024xf32>
    %c0_3 = arith.constant 0 : index
    %c0_4 = arith.constant 0 : index
    %7 = vector.load %arg3[%c0_3, %c0_4] : memref<2x1024xf32, #tpu.memory_space<vmem>>, vector<2x1024xf32>
    tpu.vector_store %arg3[%c0_3, %c0_4], %6 {strides = array<i32>} : memref<2x1024xf32, #tpu.memory_space<vmem>>, vector<2x1024xf32>,
    return
  }
  func.func @transform_0(%arg0: i32) -> (i32, i32) {
    %c0_i32 = arith.constant 0 : i32
    %c0_i32_0 = arith.constant 0 : i32
    return %arg0, %c0_i32 : i32, i32
  }
  func.func @transform_1(%arg0: i32) -> (i32, i32) {
    %c0_i32 = arith.constant 0 : i32
    %c0_i32_0 = arith.constant 0 : i32
    return %arg0, %c0_i32 : i32, i32
  }
  func.func @transform_2(%arg0: i32) -> (i32, i32) {
    %c0_i32 = arith.constant 0 : i32
    %c0_i32_0 = arith.constant 0 : i32
    return %arg0, %c0_i32 : i32, i32
  }
}

</mosaic_0001>

<llo_original>
// kernel: tpu_custom_call.1
$region0: #{tpu_custom_call.1}
  #allocation0 [shape = 'u32[]', space=smem, size = 0x4, offset = 0x4, fixed_abs, tag = 'smem constant byte address 0x4 - core index']
  #allocation1 [shape = 'u32[144,128]{1,0:T(1,128)}', space=vmem, size = 0x12000, scoped, tag = 'internal scratch']
  %s0 = inlined_call_operand.vmem [shape: u32[2,1024], index: 0, kind: input, shape index: {}]
  %s1 = inlined_call_operand.hbm [shape: f32[2,1024], index: 1, kind: input, shape index: {}, may-alias: {1,2}]
  %s2 = inlined_call_operand.hbm [shape: f32[2,1024], index: 2, kind: output, shape index: {}, may-alias: {1,2}]
  %s3 = sld [smem:[#allocation0]]
  $region22: #{tpu_custom_call.1} parent=0
    _
  %s5 = ssub.s32 1, %s3
  %s6 = scalar_select 0, %s5, %s3
  $region1: #{tpu_custom_call.1} parent=0
    #allocation2 [shape = 'u8[8192]{0}', space=vmem, size = 0x2000, scoped, tag = 'input window, operand 1, single buffered']
    #allocation3 [shape = 's32[1]{0}', space=sflag, size = 0x4, scoped, tag = 'scoped memory for tpu_custom_call.1']
    #allocation4 [shape = 's32[1]{0}', space=sflag, size = 0x4, scoped, tag = 'scoped memory for tpu_custom_call.1']
    #allocation5 [shape = 'u8[8192]{0}', space=vmem, size = 0x2000, scoped, tag = 'output window, operand 0, single buffered']
    %7 = vsyncpa [#allocation3], 0
    %8 = vsyncpa [#allocation4], 0
    // Predicated region
    $region2: #{tpu_custom_call.1} parent=1 // pred_check
      _
    $region3: #{tpu_custom_call.1} parent=1 // pred_check_branch
      %10 = sbr.rel (0) target = $region5
    $region4: #{tpu_custom_call.1} parent=1 // pred_region
      _
    $region5: #{tpu_custom_call.1} parent=1 // pred_fallthru
      _
    // Predicated region
    $region6: #{tpu_custom_call.1} parent=1 // pred_check
      _
    $region7: #{tpu_custom_call.1} parent=1 // pred_check_branch
      %12 = sbr.rel (0) target = $region9
    $region8: #{tpu_custom_call.1} parent=1 // pred_region
      %s14 = ssub.s32 256, 256
      %15 = vsyncadd [#allocation3], %s14
      %s17 = sshll.u32 [#allocation2], 4
      %s18 = int_to_ptr.vmem [resolvable:$true] %s17
      %20 = dma.hbm_to_vmem [thread:$0]  %s1, 256, %s18, [#allocation3]
    $region9: #{tpu_custom_call.1} parent=1 // pred_fallthru
      _
    // Predicated region
    $region10: #{tpu_custom_call.1} parent=1 // pred_check
      _
    $region11: #{tpu_custom_call.1} parent=1 // pred_check_branch
      %22 = sbr.rel (0) target = $region13
    $region12: #{tpu_custom_call.1} parent=1 // pred_region
      %23 = dma.done [#allocation3], 256
    $region13: #{tpu_custom_call.1} parent=1 // pred_fallthru
      _
    %v24 = vld [vmem:[#allocation2] sm:$0xff]
    %v25 = vld [vmem:[#allocation2 + $0x8] sm:$0xff]
    %v26 = vld [vmem:[%s0] sm:$0xff]
    %v27 = vld [vmem:[%s0 + $0x8] sm:$0xff]
    %vm28 = vcmp.lt.u32.totalorder %v26, 1073741824
    %vm29 = vcmp.lt.u32.totalorder %v27, 1073741824
    %v30 = vsub.f32 %v24, 1e+08
    %v31 = vsub.f32 %v25, 1e+08
    %v32 = vsel %vm28, %v30, %v24
    %v33 = vsel %vm29, %v31, %v25
    %34 = vst [vmem:[#allocation5] sm:$0xff] %v32
    %35 = vst [vmem:[#allocation5 + $0x8] sm:$0xff] %v33
    // Predicated region
    $region14: #{tpu_custom_call.1} parent=1 // pred_check
      _
    $region15: #{tpu_custom_call.1} parent=1 // pred_check_branch
      %37 = sbr.rel (0) target = $region17
    $region16: #{tpu_custom_call.1} parent=1 // pred_region
      %s39 = ssub.s32 256, 256
      %40 = vsyncadd [#allocation4], %s39
      %s42 = sshll.u32 [#allocation5], 4
      %s43 = int_to_ptr.vmem [resolvable:$true] %s42
      %45 = dma.vmem_to_hbm [thread:$0]  %s43, 256, %s2, [#allocation4]
    $region17: #{tpu_custom_call.1} parent=1 // pred_fallthru
      _
    // Predicated region
    $region18: #{tpu_custom_call.1} parent=1 // pred_check
      _
    $region19: #{tpu_custom_call.1} parent=1 // pred_check_branch
      %47 = sbr.rel (0) target = $region21
    $region20: #{tpu_custom_call.1} parent=1 // pred_region
      %48 = dma.done [#allocation4], 256
    $region21: #{tpu_custom_call.1} parent=1 // pred_fallthru
      _
    %49 = vsyncpa [#allocation3], 1
    %50 = vsyncpa [#allocation4], 1

</llo_original>
